<compile_context>
chip_gen: v7x
topology: tpu7x:2x2x1
jax: 0.10.0
libtpu: 0.0.40
codegen_flags: <defaults>
</compile_context>

<pallas_src>
import math
from functools import partial

import jax
import jax.numpy as jnp
from jax.experimental import pallas as pl
from jax.experimental.pallas import tpu as pltpu

LANE = 128            # lane width: feature dims padded to multiples of this
BF16_TILE_ROWS = 16   # bf16 sublane tile is (16, 128): batch padded to multiples of 16
MAX_BATCH_TILE = 256  # batch tile per grid step (feeds the 256-wide MXU on v6e/v7x)


def _round_up(x, m):
    return (x + m - 1) // m * m


def _apply_activation(y, activation):
    """Activation in f32 on the VPU/EUP."""
    if activation == "tanh":
        return jnp.tanh(y)
    if activation == "sigmoid":
        return jax.nn.sigmoid(y)
    if activation == "leaky_relu":
        return jnp.maximum(y, 0.01 * y)   # single VPU max vs cmp+mul+select
    # 'relu' and any unknown name -> ReLU (matches PyTorch's .get(..., ReLU))
    return jnp.maximum(y, 0.0)


# ----------------------------------------------------------------------------
# Fused MLP kernel: the whole network in one kernel body per batch tile.
# Inter-layer activations never leave VMEM/registers.
# ----------------------------------------------------------------------------
def _fused_mlp_kernel(*refs, n_layers, activation, n_pads):
    x_ref = refs[0]                       # bf16 (tm, K0_pad) batch tile
    w_refs = refs[1:1 + n_layers]         # bf16 (K_pad_i, N_pad_i), VMEM-resident
    b_ref = refs[1 + n_layers]            # f32  (L, N_max_pad) stacked biases
    o_ref = refs[-1]                      # f32  (tm, N_out_pad)

    h = x_ref[...]
    for i in range(n_layers):             # unrolled at trace time (static depth)
        w = w_refs[i][...]
        n_pad = n_pads[i]
        b = b_ref[i:i + 1, :n_pad]        # (1, n_pad) static slice, lane-aligned
        y = jnp.dot(h, w, preferred_element_type=jnp.float32) + b
        if i < n_layers - 1:
            y = _apply_activation(y, activation)
            h = y.astype(jnp.bfloat16)    # bf16 back into the MXU for next layer
        else:
            o_ref[...] = y.astype(o_ref.dtype)


@partial(jax.jit, static_argnames=("activation",))
def fused_mlp_forward(x, weights_bf16, bias_stack_f32, *, activation):
    """Run the whole padded MLP in a single Pallas TPU kernel (batch-tiled grid).

    x              : (B, in_features) float32 (unpadded)
    weights_bf16   : list of (K_pad_i, N_pad_i) bfloat16, zero-padded
    bias_stack_f32 : (L, N_max_pad) float32, zero-padded per-layer biases
    returns        : (B_pad, N_pad_last) float32 padded output
    """
    B, K = x.shape
    n_layers = len(weights_bf16)
    K_pad = int(weights_bf16[0].shape[0])
    n_pads = tuple(int(w.shape[1]) for w in weights_bf16)
    N_out_pad = n_pads[-1]

    # dtype-aware batch padding (bf16 packs two rows per sublane).
    B_pad = _round_up(max(B, BF16_TILE_ROWS), BF16_TILE_ROWS)
    if B_pad > MAX_BATCH_TILE:
        tm = MAX_BATCH_TILE
        B_pad = _round_up(B_pad, tm)
    else:
        tm = B_pad
    grid = (B_pad // tm,)

    # Pad the bf16 cast directly (no zeros+scatter round trip).
    x_pad = jnp.pad(x.astype(jnp.bfloat16), ((0, B_pad - B), (0, K_pad - K)))

    # VMEM budget: resident weights + stacked biases + double-buffered in/out tiles
    # + per-layer f32 intermediates + headroom. Floor 32 MiB, cap 64 MiB (<= physical
    # on every generation; v5e's scoped default of 16 MiB would otherwise bind).
    weight_bytes = sum(int(w.size) * 2 for w in weights_bf16)
    bias_bytes = int(bias_stack_f32.size) * 4
    io_tile_bytes = 2 * tm * K_pad * 2 + 2 * tm * N_out_pad * 4
    interm_bytes = 4 * tm * max(n_pads) * 4
    needed = weight_bytes + bias_bytes + io_tile_bytes + interm_bytes + (4 << 20)
    vmem_limit = int(min(max(needed, 32 << 20), 64 << 20))

    in_specs = [pl.BlockSpec((tm, K_pad), lambda b: (b, 0))]          # batch-tiled x
    for w in weights_bf16:
        kp, npad = int(w.shape[0]), int(w.shape[1])
        in_specs.append(pl.BlockSpec((kp, npad), lambda b: (0, 0)))   # resident weights
    in_specs.append(
        pl.BlockSpec(tuple(int(d) for d in bias_stack_f32.shape), lambda b: (0, 0)))

    out_pad = pl.pallas_call(
        partial(_fused_mlp_kernel, n_layers=n_layers, activation=activation,
                n_pads=n_pads),
        out_shape=jax.ShapeDtypeStruct((B_pad, N_out_pad), jnp.float32),
        grid=grid,
        in_specs=in_specs,
        out_specs=pl.BlockSpec((tm, N_out_pad), lambda b: (b, 0)),
        compiler_params=pltpu.CompilerParams(
            dimension_semantics=("parallel",),       # megacore sharding on v7x
            vmem_limit_bytes=vmem_limit),
    )(x_pad, *weights_bf16, bias_stack_f32)
    return out_pad


# ----------------------------------------------------------------------------
# ParametrizedDNN re-implemented around the fused Pallas kernel.
# ----------------------------------------------------------------------------
class ParametrizedDNNPallas:
    def __init__(self, input_size, hidden_sizes, output_size,
                 activation="relu", dropout_rate=0.0, key=None):
        self.activation = activation
        self.dropout_rate = dropout_rate
        self.input_size = input_size
        self.output_size = output_size
        if key is None:
            key = jax.random.PRNGKey(0)

        sizes = [input_size] + list(hidden_sizes) + [output_size]
        padded = [_round_up(s, LANE) for s in sizes]
        n_layers = len(sizes) - 1
        n_max_pad = max(padded[1:])

        # Unpadded f32 params (reference) and padded bf16 weights / stacked f32 biases.
        self.weights_f32, self.biases_f32 = [], []
        self.weights_pad_bf16 = []
        bias_stack = jnp.zeros((n_layers, n_max_pad), jnp.float32)
        for i in range(n_layers):
            fan_in, fan_out = sizes[i], sizes[i + 1]
            kin, kout = padded[i], padded[i + 1]
            key, wk, bk = jax.random.split(key, 3)
            bound = 1.0 / math.sqrt(fan_in)  # PyTorch nn.Linear default init range
            w = jax.random.uniform(wk, (fan_in, fan_out), jnp.float32,
                                   minval=-bound, maxval=bound)
            b = jax.random.uniform(bk, (1, fan_out), jnp.float32,
                                   minval=-bound, maxval=bound)
            self.weights_f32.append(w)
            self.biases_f32.append(b)

            w_pad = jnp.zeros((kin, kout), jnp.float32).at[:fan_in, :fan_out].set(w)
            self.weights_pad_bf16.append(w_pad.astype(jnp.bfloat16))
            bias_stack = bias_stack.at[i, :fan_out].set(b[0])
        self.bias_stack_f32 = bias_stack

    def __call__(self, x):
        B = x.shape[0]
        out_pad = fused_mlp_forward(x, self.weights_pad_bf16, self.bias_stack_f32,
                                    activation=self.activation)
        return out_pad[:B, :self.output_size]


# ----------------------------------------------------------------------------
# Pure-JAX references for correctness checking.
# ----------------------------------------------------------------------------
def reference_forward_bf16(model, x):
    """Same bf16-matmul / f32-accumulate numerics as the kernel."""
    h = x.astype(jnp.bfloat16)
    n = len(model.weights_f32)
    for i in range(n):
        w = model.weights_f32[i].astype(jnp.bfloat16)
        y = jnp.dot(h, w, preferred_element_type=jnp.float32) + model.biases_f32[i]
        if i < n - 1:
            y = _apply_activation(y, model.activation)
            h = y.astype(jnp.bfloat16)
        else:
            return y


def reference_forward_f32(model, x):
    """Full-f32 reference (original module semantics)."""
    n = len(model.weights_f32)
    for i in range(n):
        y = x @ model.weights_f32[i] + model.biases_f32[i]
        if i < n - 1:
            x = _apply_activation(y, model.activation)
        else:
            return y


if __name__ == "__main__":
    key = jax.random.PRNGKey(0)

    # Config 1: relu, batch 8.
    key, xkey, mkey = jax.random.split(key, 3)
    x = jax.random.normal(xkey, (8, 16), jnp.float32)
    model = ParametrizedDNNPallas(16, [32, 32], 4, activation="relu",
                                  dropout_rate=0.0, key=mkey)
    out = jax.block_until_ready(model(x))
    assert out.shape == (8, 4)
    assert jnp.allclose(out, reference_forward_bf16(model, x), atol=1e-3, rtol=1e-3), \
        "relu: mismatch vs bf16-matched reference"
    assert jnp.allclose(out, reference_forward_f32(model, x), atol=3e-2, rtol=3e-2), \
        "relu: mismatch vs f32 reference"

    # Config 2: tanh, ragged batch 5 (exercises batch padding + slice-back).
    key, xkey2, mkey2 = jax.random.split(key, 3)
    x2 = jax.random.normal(xkey2, (5, 24), jnp.float32)
    model2 = ParametrizedDNNPallas(24, [48], 3, activation="tanh",
                                   dropout_rate=0.0, key=mkey2)
    out2 = jax.block_until_ready(model2(x2))
    assert out2.shape == (5, 3)
    assert jnp.allclose(out2, reference_forward_bf16(model2, x2), atol=1e-3, rtol=1e-3), \
        "tanh: mismatch vs bf16-matched reference"
    assert jnp.allclose(out2, reference_forward_f32(model2, x2), atol=3e-2, rtol=3e-2), \
        "tanh: mismatch vs f32 reference"

    print("KERNEL_OK")
</pallas_src>

<mosaic_0001>
module attributes {stable_mosaic.version = 11 : i64} {
  func.func @_fused_mlp_kernel(%arg0: i32, %arg1: memref<16x128xbf16, #tpu.memory_space<vmem>>, %arg2: memref<128x128xbf16, #tpu.memory_space<vmem>>, %arg3: memref<128x128xbf16, #tpu.memory_space<vmem>>, %arg4: memref<128x128xbf16, #tpu.memory_space<vmem>>, %arg5: memref<3x128xf32, #tpu.memory_space<vmem>>, %arg6: memref<16x128xf32, #tpu.memory_space<vmem>>) attributes {dimension_semantics = [#tpu.dimension_semantics<parallel>], iteration_bounds = array<i64: 1>, scalar_prefetch = 0 : i64, scratch_operands = 0 : i64, tpu.core_type = #tpu.core_type<tc>, window_params = [{transform_indices = @transform_0, window_bounds = array<i64: 16, 128>}, {pipeline_mode = #tpu.pipeline_mode<synchronous>, transform_indices = @transform_1, window_bounds = array<i64: 128, 128>}, {pipeline_mode = #tpu.pipeline_mode<synchronous>, transform_indices = @transform_2, window_bounds = array<i64: 128, 128>}, {pipeline_mode = #tpu.pipeline_mode<synchronous>, transform_indices = @transform_3, window_bounds = array<i64: 128, 128>}, {pipeline_mode = #tpu.pipeline_mode<synchronous>, transform_indices = @transform_4, window_bounds = array<i64: 3, 128>}, {transform_indices = @transform_5, window_bounds = array<i64: 16, 128>}]} {
    %c0 = arith.constant 0 : index
    %c0_0 = arith.constant 0 : index
    %0 = vector.load %arg1[%c0, %c0_0] : memref<16x128xbf16, #tpu.memory_space<vmem>>, vector<16x128xbf16>
    %c0_1 = arith.constant 0 : index
    %c0_2 = arith.constant 0 : index
    %1 = vector.load %arg2[%c0_1, %c0_2] : memref<128x128xbf16, #tpu.memory_space<vmem>>, vector<128x128xbf16>
    %c0_3 = arith.constant 0 : index
    %c0_4 = arith.constant 0 : index
    %2 = vector.load %arg5[%c0_3, %c0_4] : memref<3x128xf32, #tpu.memory_space<vmem>>, vector<1x128xf32>
    %cst = arith.constant dense<0.000000e+00> : vector<16x128xf32>
    %3 = tpu.matmul %0, %1, %cst {dimension_numbers = #tpu.dot_dimension_numbers<[1], [0], [0], [1], [0, 0, 1, 1], [], []>} : vector<16x128xbf16>, vector<128x128xbf16>, vector<16x128xf32> -> vector<16x128xf32>
    %4 = vector.broadcast %2 : vector<1x128xf32> to vector<16x128xf32>
    %5 = arith.addf %3, %4 : vector<16x128xf32>
    %cst_5 = arith.constant 0.000000e+00 : f32
    %6 = vector.broadcast %cst_5 : f32 to vector<16x128xf32>
    %7 = arith.maximumf %5, %6 : vector<16x128xf32>
    %8 = arith.truncf %7 : vector<16x128xf32> to vector<16x128xbf16>
    %c0_6 = arith.constant 0 : index
    %c0_7 = arith.constant 0 : index
    %9 = vector.load %arg3[%c0_6, %c0_7] : memref<128x128xbf16, #tpu.memory_space<vmem>>, vector<128x128xbf16>
    %c1 = arith.constant 1 : index
    %c0_8 = arith.constant 0 : index
    %10 = vector.load %arg5[%c1, %c0_8] : memref<3x128xf32, #tpu.memory_space<vmem>>, vector<1x128xf32>
    %cst_9 = arith.constant dense<0.000000e+00> : vector<16x128xf32>
    %11 = tpu.matmul %8, %9, %cst_9 {dimension_numbers = #tpu.dot_dimension_numbers<[1], [0], [0], [1], [0, 0, 1, 1], [], []>} : vector<16x128xbf16>, vector<128x128xbf16>, vector<16x128xf32> -> vector<16x128xf32>
    %12 = vector.broadcast %10 : vector<1x128xf32> to vector<16x128xf32>
    %13 = arith.addf %11, %12 : vector<16x128xf32>
    %cst_10 = arith.constant 0.000000e+00 : f32
    %14 = vector.broadcast %cst_10 : f32 to vector<16x128xf32>
    %15 = arith.maximumf %13, %14 : vector<16x128xf32>
    %16 = arith.truncf %15 : vector<16x128xf32> to vector<16x128xbf16>
    %c0_11 = arith.constant 0 : index
    %c0_12 = arith.constant 0 : index
    %17 = vector.load %arg4[%c0_11, %c0_12] : memref<128x128xbf16, #tpu.memory_space<vmem>>, vector<128x128xbf16>
    %c2 = arith.constant 2 : index
    %c0_13 = arith.constant 0 : index
    %18 = vector.load %arg5[%c2, %c0_13] : memref<3x128xf32, #tpu.memory_space<vmem>>, vector<1x128xf32>
    %cst_14 = arith.constant dense<0.000000e+00> : vector<16x128xf32>
    %19 = tpu.matmul %16, %17, %cst_14 {dimension_numbers = #tpu.dot_dimension_numbers<[1], [0], [0], [1], [0, 0, 1, 1], [], []>} : vector<16x128xbf16>, vector<128x128xbf16>, vector<16x128xf32> -> vector<16x128xf32>
    %20 = vector.broadcast %18 : vector<1x128xf32> to vector<16x128xf32>
    %21 = arith.addf %19, %20 : vector<16x128xf32>
    %c0_15 = arith.constant 0 : index
    %c0_16 = arith.constant 0 : index
    %22 = vector.load %arg6[%c0_15, %c0_16] : memref<16x128xf32, #tpu.memory_space<vmem>>, vector<16x128xf32>
    tpu.vector_store %arg6[%c0_15, %c0_16], %21 {strides = array<i32>} : memref<16x128xf32, #tpu.memory_space<vmem>>, vector<16x128xf32>,
    return
  }
  func.func @transform_0(%arg0: i32) -> (i32, i32) {
    %c0_i32 = arith.constant 0 : i32
    %c0_i32_0 = arith.constant 0 : i32
    return %arg0, %c0_i32 : i32, i32
  }
  func.func @transform_1(%arg0: i32) -> (i32, i32) {
    %c0_i32 = arith.constant 0 : i32
    %c0_i32_0 = arith.constant 0 : i32
    %c0_i32_1 = arith.constant 0 : i32
    return %c0_i32, %c0_i32_0 : i32, i32
  }
  func.func @transform_2(%arg0: i32) -> (i32, i32) {
    %c0_i32 = arith.constant 0 : i32
    %c0_i32_0 = arith.constant 0 : i32
    %c0_i32_1 = arith.constant 0 : i32
    return %c0_i32, %c0_i32_0 : i32, i32
  }
  func.func @transform_3(%arg0: i32) -> (i32, i32) {
    %c0_i32 = arith.constant 0 : i32
    %c0_i32_0 = arith.constant 0 : i32
    %c0_i32_1 = arith.constant 0 : i32
    return %c0_i32, %c0_i32_0 : i32, i32
  }
  func.func @transform_4(%arg0: i32) -> (i32, i32) {
    %c0_i32 = arith.constant 0 : i32
    %c0_i32_0 = arith.constant 0 : i32
    %c0_i32_1 = arith.constant 0 : i32
    return %c0_i32, %c0_i32_0 : i32, i32
  }
  func.func @transform_5(%arg0: i32) -> (i32, i32) {
    %c0_i32 = arith.constant 0 : i32
    %c0_i32_0 = arith.constant 0 : i32
    return %arg0, %c0_i32 : i32, i32
  }
}

</mosaic_0001>

<llo_original>
// kernel: fused_mlp_forward.1
$region0: #{fused_mlp_forward.1}
  #allocation0 [shape = 'u32[]', space=smem, size = 0x4, offset = 0x4, fixed_abs, tag = 'smem constant byte address 0x4 - core index']
  #allocation1 [shape = 'u32[144,128]{1,0:T(1,128)}', space=vmem, size = 0x12000, scoped, tag = 'internal scratch']
  %s0 = inlined_call_operand.vmem [shape: bf16[16,128], index: 0, kind: input, shape index: {}]
  %s1 = inlined_call_operand.hbm [shape: bf16[128,128], index: 1, kind: input, shape index: {}]
  %s2 = inlined_call_operand.hbm [shape: bf16[128,128], index: 2, kind: input, shape index: {}]
  %s3 = inlined_call_operand.hbm [shape: bf16[128,128], index: 3, kind: input, shape index: {}]
  %s4 = inlined_call_operand.vmem [shape: f32[3,128], index: 4, kind: input, shape index: {}]
  %s5 = inlined_call_operand.hbm [shape: f32[16,128], index: 5, kind: output, shape index: {}]
  %s6 = sld [smem:[#allocation0]]
  $region42: #{fused_mlp_forward.1} parent=0
    _
  %s8 = ssub.s32 1, %s6
  %s9 = scalar_select 0, %s8, %s6
  $region1: #{fused_mlp_forward.1} parent=0
    #allocation2 [shape = 'u8[32768]{0}', space=vmem, size = 0x8000, scoped, tag = 'input window, operand 1, single buffered']
    #allocation3 [shape = 's32[1]{0}', space=sflag, size = 0x4, scoped, tag = 'scoped memory for fused_mlp_forward.1']
    #allocation4 [shape = 's32[1]{0}', space=sflag, size = 0x4, scoped, tag = 'scoped memory for fused_mlp_forward.1']
    #allocation5 [shape = 'u8[32768]{0}', space=vmem, size = 0x8000, scoped, tag = 'input window, operand 2, single buffered']
    #allocation6 [shape = 's32[1]{0}', space=sflag, size = 0x4, scoped, tag = 'scoped memory for fused_mlp_forward.1']
    #allocation7 [shape = 'u8[32768]{0}', space=vmem, size = 0x8000, scoped, tag = 'input window, operand 3, single buffered']
    #allocation8 [shape = 'u8[8192]{0}', space=vmem, size = 0x2000, scoped, tag = 'output window, operand 0, single buffered']
    %10 = vsyncpa [#allocation3], 0
    %11 = vsyncpa [#allocation6], 0
    %12 = vsyncpa [#allocation4], 0
    // Predicated region
    $region2: #{fused_mlp_forward.1} parent=1 // pred_check
      _
    $region3: #{fused_mlp_forward.1} parent=1 // pred_check_branch
      %14 = sbr.rel (0) target = $region5
    $region4: #{fused_mlp_forward.1} parent=1 // pred_region
      _
    $region5: #{fused_mlp_forward.1} parent=1 // pred_fallthru
      _
    // Predicated region
    $region6: #{fused_mlp_forward.1} parent=1 // pred_check
      _
    $region7: #{fused_mlp_forward.1} parent=1 // pred_check_branch
      %16 = sbr.rel (0) target = $region9
    $region8: #{fused_mlp_forward.1} parent=1 // pred_region
      %s18 = ssub.s32 1024, 1024
      %19 = vsyncadd [#allocation3], %s18
      %s20 = sshll.u32 [#allocation2], 4
      %s21 = int_to_ptr.vmem [resolvable:$true] %s20
      %26 = dma.hbm_to_vmem [thread:$0]  %s1, 1024, %s21, [#allocation3], 64, 64, 4
    $region9: #{fused_mlp_forward.1} parent=1 // pred_fallthru
      _
    // Predicated region
    $region10: #{fused_mlp_forward.1} parent=1 // pred_check
      _
    $region11: #{fused_mlp_forward.1} parent=1 // pred_check_branch
      %28 = sbr.rel (0) target = $region13
    $region12: #{fused_mlp_forward.1} parent=1 // pred_region
      %s30 = ssub.s32 1024, 1024
      %31 = vsyncadd [#allocation6], %s30
      %s32 = sshll.u32 [#allocation5], 4
      %s33 = int_to_ptr.vmem [resolvable:$true] %s32
      %38 = dma.hbm_to_vmem [thread:$0]  %s2, 1024, %s33, [#allocation6], 64, 64, 4
    $region13: #{fused_mlp_forward.1} parent=1 // pred_fallthru
      _
    // Predicated region
    $region14: #{fused_mlp_forward.1} parent=1 // pred_check
      _
    $region15: #{fused_mlp_forward.1} parent=1 // pred_check_branch
      %40 = sbr.rel (0) target = $region17
    $region16: #{fused_mlp_forward.1} parent=1 // pred_region
      %s42 = ssub.s32 1024, 1024
      %43 = vsyncadd [#allocation6], %s42
      %s44 = sshll.u32 [#allocation7], 4
      %s45 = int_to_ptr.vmem [resolvable:$true] %s44
      %50 = dma.hbm_to_vmem [thread:$0]  %s3, 1024, %s45, [#allocation6], 64, 64, 4
    $region17: #{fused_mlp_forward.1} parent=1 // pred_fallthru
      _
    // Predicated region
    $region18: #{fused_mlp_forward.1} parent=1 // pred_check
      _
    $region19: #{fused_mlp_forward.1} parent=1 // pred_check_branch
      %52 = sbr.rel (0) target = $region21
    $region20: #{fused_mlp_forward.1} parent=1 // pred_region
      _
    $region21: #{fused_mlp_forward.1} parent=1 // pred_fallthru
      _
    // Predicated region
    $region22: #{fused_mlp_forward.1} parent=1 // pred_check
      _
    $region23: #{fused_mlp_forward.1} parent=1 // pred_check_branch
      %54 = sbr.rel (0) target = $region25
    $region24: #{fused_mlp_forward.1} parent=1 // pred_region
      %55 = dma.done [#allocation3], 1024
    $region25: #{fused_mlp_forward.1} parent=1 // pred_fallthru
      _
    // Predicated region
    $region26: #{fused_mlp_forward.1} parent=1 // pred_check
      _
    $region27: #{fused_mlp_forward.1} parent=1 // pred_check_branch
      %57 = sbr.rel (0) target = $region29
    $region28: #{fused_mlp_forward.1} parent=1 // pred_region
      %58 = dma.done [#allocation6], 1024
    $region29: #{fused_mlp_forward.1} parent=1 // pred_fallthru
      _
    // Predicated region
    $region30: #{fused_mlp_forward.1} parent=1 // pred_check
      _
    $region31: #{fused_mlp_forward.1} parent=1 // pred_check_branch
      %60 = sbr.rel (0) target = $region33
    $region32: #{fused_mlp_forward.1} parent=1 // pred_region
      %61 = dma.done [#allocation6], 1024
    $region33: #{fused_mlp_forward.1} parent=1 // pred_fallthru
      _
    %v63 = vld [vmem:[%s0] sm:$0xf]
    %v64 = vld [vmem:[%s0 + $0x4] sm:$0xf]
    %v65 = vld [vmem:[#allocation2] sm:$0xf]
    %v66 = vld [vmem:[#allocation2 + $0x4] sm:$0xf]
    %v67 = vld [vmem:[#allocation2 + $0x8] sm:$0xf]
    %v68 = vld [vmem:[#allocation2 + $0xc] sm:$0xf]
    %v69 = vld [vmem:[#allocation2 + $0x10] sm:$0xf]
    %v70 = vld [vmem:[#allocation2 + $0x14] sm:$0xf]
    %v71 = vld [vmem:[#allocation2 + $0x18] sm:$0xf]
    %v72 = vld [vmem:[#allocation2 + $0x1c] sm:$0xf]
    %v73 = vld [vmem:[#allocation2 + $0x20] sm:$0xf]
    %v74 = vld [vmem:[#allocation2 + $0x24] sm:$0xf]
    %v75 = vld [vmem:[#allocation2 + $0x28] sm:$0xf]
    %v76 = vld [vmem:[#allocation2 + $0x2c] sm:$0xf]
    %v77 = vld [vmem:[#allocation2 + $0x30] sm:$0xf]
    %v78 = vld [vmem:[#allocation2 + $0x34] sm:$0xf]
    %v79 = vld [vmem:[#allocation2 + $0x38] sm:$0xf]
    %v80 = vld [vmem:[#allocation2 + $0x3c] sm:$0xf]
    %v81 = vld [vmem:[%s4] sm:$0x1]
    %v82 = vlaneseq
    %v83 = vshrl.u32 %v82, 7
    %v84 = vsub.s32 0, %v83
    %v85 = vrot.slane %v81, %v84
    %v88 = vunpack.c.l.b16 %v63
    %v89 = vunpack.c.l.b16 %v64
    %v90 = vpack.c.b16 %v89, %v88
    %v108 = vunpack.c.l.b16 %v65
    %v109 = vunpack.c.l.b16 %v66
    %v110 = vunpack.c.l.b16 %v67
    %v111 = vunpack.c.l.b16 %v68
    %v112 = vunpack.c.l.b16 %v69
    %v113 = vunpack.c.l.b16 %v70
    %v114 = vunpack.c.l.b16 %v71
    %v115 = vunpack.c.l.b16 %v72
    %v116 = vunpack.c.l.b16 %v73
    %v117 = vunpack.c.l.b16 %v74
    %v118 = vunpack.c.l.b16 %v75
    %v119 = vunpack.c.l.b16 %v76
    %v120 = vunpack.c.l.b16 %v77
    %v121 = vunpack.c.l.b16 %v78
    %v122 = vunpack.c.l.b16 %v79
    %v123 = vunpack.c.l.b16 %v80
    %v124 = vpack.c.b16 %v109, %v108
    %v125 = vpack.c.b16 %v111, %v110
    %v126 = vpack.c.b16 %v113, %v112
    %v127 = vpack.c.b16 %v115, %v114
    %v128 = vpack.c.b16 %v117, %v116
    %v129 = vpack.c.b16 %v119, %v118
    %v130 = vpack.c.b16 %v121, %v120
    %v131 = vpack.c.b16 %v123, %v122
    %140 = vmatprep.subr.bf16.mxu0 0
    %141 = vmatpush1.bf16.msra.mxu0 %v124
    %142 = vmatprep.subr.bf16.mxu0 0
    %143 = vmatpush1.bf16.msra.mxu0 %v125
    %144 = vmatprep.subr.bf16.mxu0 0
    %145 = vmatpush1.bf16.msra.mxu0 %v126
    %146 = vmatprep.subr.bf16.mxu0 0
    %147 = vmatpush1.bf16.msra.mxu0 %v127
    %148 = vmatprep.subr.bf16.mxu0 0
    %149 = vmatpush1.bf16.msra.mxu0 %v128
    %150 = vmatprep.subr.bf16.mxu0 0
    %151 = vmatpush1.bf16.msra.mxu0 %v129
    %152 = vmatprep.subr.bf16.mxu0 0
    %153 = vmatpush1.bf16.msra.mxu0 %v130
    %154 = vmatprep.subr.bf16.mxu0 0
    %155 = vmatpush1.bf16.msra.mxu0 %v131
    %156 = vmatprep.subr.bf16.mxu0 0
    %157 = vmatpush1.bf16.msra.mxu0 0
    %158 = vmatprep.subr.bf16.mxu0 0
    %159 = vmatpush1.bf16.msra.mxu0 0
    %160 = vmatprep.subr.bf16.mxu0 0
    %161 = vmatpush1.bf16.msra.mxu0 0
    %162 = vmatprep.subr.bf16.mxu0 0
    %163 = vmatpush1.bf16.msra.mxu0 0
    %164 = vmatprep.subr.bf16.mxu0 0
    %165 = vmatpush1.bf16.msra.mxu0 0
    %166 = vmatprep.subr.bf16.mxu0 0
    %167 = vmatpush1.bf16.msra.mxu0 0
    %168 = vmatprep.subr.bf16.mxu0 0
    %169 = vmatpush1.bf16.msra.mxu0 0
    %170 = vmatprep.subr.bf16.mxu0 0
    %171 = vmatpush1.bf16.msra.mxu0 0
    %172 = vmatprep.mubr.bf16.mxu0 0
    %173 = vmatmul.mubr.bf16.gmra.mrb[0].mxu0 %v90
    %v174 = vpop.f32.mrb[0].mxu0
    %v175 = vadd.f32 %v85, %v174
    %v176 = vpop.f32.mrb[0].mxu0
    %v177 = vpop.f32.mrb[0].mxu0
    %v178 = vadd.f32 %v85, %v177
    %v179 = vpop.f32.mrb[0].mxu0
    %180 = vdwg.mxu0
    %v181 = vmax.f32 %v175, 0.0
    %v182 = vmax.f32 %v178, 0.0
    %v183 = vpack.c.bf16 %v182, %v181
    %v184 = vld [vmem:[#allocation5] sm:$0xf]
    %v185 = vld [vmem:[#allocation5 + $0x4] sm:$0xf]
    %v186 = vld [vmem:[#allocation5 + $0x8] sm:$0xf]
    %v187 = vld [vmem:[#allocation5 + $0xc] sm:$0xf]
    %v188 = vld [vmem:[#allocation5 + $0x10] sm:$0xf]
    %v189 = vld [vmem:[#allocation5 + $0x14] sm:$0xf]
    %v190 = vld [vmem:[#allocation5 + $0x18] sm:$0xf]
    %v191 = vld [vmem:[#allocation5 + $0x1c] sm:$0xf]
    %v192 = vld [vmem:[#allocation5 + $0x20] sm:$0xf]
    %v193 = vld [vmem:[#allocation5 + $0x24] sm:$0xf]
    %v194 = vld [vmem:[#allocation5 + $0x28] sm:$0xf]
    %v195 = vld [vmem:[#allocation5 + $0x2c] sm:$0xf]
    %v196 = vld [vmem:[#allocation5 + $0x30] sm:$0xf]
    %v197 = vld [vmem:[#allocation5 + $0x34] sm:$0xf]
    %v198 = vld [vmem:[#allocation5 + $0x38] sm:$0xf]
    %v199 = vld [vmem:[#allocation5 + $0x3c] sm:$0xf]
    %v200 = vld [vmem:[%s4 + $0x1] sm:$0x1]
    %v201 = vlaneseq
    %v202 = vshrl.u32 %v201, 7
    %v203 = vsub.s32 0, %v202
    %v204 = vrot.slane %v200, %v203
    %v221 = vunpack.c.l.b16 %v184
    %v222 = vunpack.c.l.b16 %v185
    %v223 = vunpack.c.l.b16 %v186
    %v224 = vunpack.c.l.b16 %v187
    %v225 = vunpack.c.l.b16 %v188
    %v226 = vunpack.c.l.b16 %v189
    %v227 = vunpack.c.l.b16 %v190
    %v228 = vunpack.c.l.b16 %v191
    %v229 = vunpack.c.l.b16 %v192
    %v230 = vunpack.c.l.b16 %v193
    %v231 = vunpack.c.l.b16 %v194
    %v232 = vunpack.c.l.b16 %v195
    %v233 = vunpack.c.l.b16 %v196
    %v234 = vunpack.c.l.b16 %v197
    %v235 = vunpack.c.l.b16 %v198
    %v236 = vunpack.c.l.b16 %v199
    %v237 = vpack.c.b16 %v222, %v221
    %v238 = vpack.c.b16 %v224, %v223
    %v239 = vpack.c.b16 %v226, %v225
    %v240 = vpack.c.b16 %v228, %v227
    %v241 = vpack.c.b16 %v230, %v229
    %v242 = vpack.c.b16 %v232, %v231
    %v243 = vpack.c.b16 %v234, %v233
    %v244 = vpack.c.b16 %v236, %v235
    %253 = vmatprep.subr.bf16.mxu0 0
    %254 = vmatpush1.bf16.msra.mxu0 %v237
    %255 = vmatprep.subr.bf16.mxu0 0
    %256 = vmatpush1.bf16.msra.mxu0 %v238
    %257 = vmatprep.subr.bf16.mxu0 0
    %258 = vmatpush1.bf16.msra.mxu0 %v239
    %259 = vmatprep.subr.bf16.mxu0 0
    %260 = vmatpush1.bf16.msra.mxu0 %v240
    %261 = vmatprep.subr.bf16.mxu0 0
    %262 = vmatpush1.bf16.msra.mxu0 %v241
    %263 = vmatprep.subr.bf16.mxu0 0
    %264 = vmatpush1.bf16.msra.mxu0 %v242
    %265 = vmatprep.subr.bf16.mxu0 0
    %266 = vmatpush1.bf16.msra.mxu0 %v243
    %267 = vmatprep.subr.bf16.mxu0 0
    %268 = vmatpush1.bf16.msra.mxu0 %v244
    %269 = vmatprep.subr.bf16.mxu0 0
    %270 = vmatpush1.bf16.msra.mxu0 0
    %271 = vmatprep.subr.bf16.mxu0 0
    %272 = vmatpush1.bf16.msra.mxu0 0
    %273 = vmatprep.subr.bf16.mxu0 0
    %274 = vmatpush1.bf16.msra.mxu0 0
    %275 = vmatprep.subr.bf16.mxu0 0
    %276 = vmatpush1.bf16.msra.mxu0 0
    %277 = vmatprep.subr.bf16.mxu0 0
    %278 = vmatpush1.bf16.msra.mxu0 0
    %279 = vmatprep.subr.bf16.mxu0 0
    %280 = vmatpush1.bf16.msra.mxu0 0
    %281 = vmatprep.subr.bf16.mxu0 0
    %282 = vmatpush1.bf16.msra.mxu0 0
    %283 = vmatprep.subr.bf16.mxu0 0
    %284 = vmatpush1.bf16.msra.mxu0 0
    %285 = vmatprep.mubr.bf16.mxu0 0
    %286 = vmatmul.mubr.bf16.gmra.mrb[0].mxu0 %v183
    %v287 = vpop.f32.mrb[0].mxu0
    %v288 = vadd.f32 %v204, %v287
    %v289 = vpop.f32.mrb[0].mxu0
    %v290 = vpop.f32.mrb[0].mxu0
    %v291 = vadd.f32 %v204, %v290
    %v292 = vpop.f32.mrb[0].mxu0
    %293 = vdwg.mxu0
    %v294 = vmax.f32 %v288, 0.0
    %v295 = vmax.f32 %v291, 0.0
    %v296 = vpack.c.bf16 %v295, %v294
    %v297 = vld [vmem:[#allocation7] sm:$0xf]
    %v298 = vld [vmem:[#allocation7 + $0x4] sm:$0xf]
    %v299 = vld [vmem:[#allocation7 + $0x8] sm:$0xf]
    %v300 = vld [vmem:[#allocation7 + $0xc] sm:$0xf]
    %v301 = vld [vmem:[#allocation7 + $0x10] sm:$0xf]
    %v302 = vld [vmem:[#allocation7 + $0x14] sm:$0xf]
    %v303 = vld [vmem:[#allocation7 + $0x18] sm:$0xf]
    %v304 = vld [vmem:[#allocation7 + $0x1c] sm:$0xf]
    %v305 = vld [vmem:[#allocation7 + $0x20] sm:$0xf]
    %v306 = vld [vmem:[#allocation7 + $0x24] sm:$0xf]
    %v307 = vld [vmem:[#allocation7 + $0x28] sm:$0xf]
    %v308 = vld [vmem:[#allocation7 + $0x2c] sm:$0xf]
    %v309 = vld [vmem:[#allocation7 + $0x30] sm:$0xf]
    %v310 = vld [vmem:[#allocation7 + $0x34] sm:$0xf]
    %v311 = vld [vmem:[#allocation7 + $0x38] sm:$0xf]
    %v312 = vld [vmem:[#allocation7 + $0x3c] sm:$0xf]
    %v313 = vld [vmem:[%s4 + $0x2] sm:$0x1]
    %v314 = vlaneseq
    %v315 = vshrl.u32 %v314, 7
    %v316 = vsub.s32 0, %v315
    %v317 = vrot.slane %v313, %v316
    %v334 = vunpack.c.l.b16 %v297
    %v335 = vunpack.c.l.b16 %v298
    %v336 = vunpack.c.l.b16 %v299
    %v337 = vunpack.c.l.b16 %v300
    %v338 = vunpack.c.l.b16 %v301
    %v339 = vunpack.c.l.b16 %v302
    %v340 = vunpack.c.l.b16 %v303
    %v341 = vunpack.c.l.b16 %v304
    %v342 = vunpack.c.l.b16 %v305
    %v343 = vunpack.c.l.b16 %v306
    %v344 = vunpack.c.l.b16 %v307
    %v345 = vunpack.c.l.b16 %v308
    %v346 = vunpack.c.l.b16 %v309
    %v347 = vunpack.c.l.b16 %v310
    %v348 = vunpack.c.l.b16 %v311
    %v349 = vunpack.c.l.b16 %v312
    %v350 = vpack.c.b16 %v335, %v334
    %v351 = vpack.c.b16 %v337, %v336
    %v352 = vpack.c.b16 %v339, %v338
    %v353 = vpack.c.b16 %v341, %v340
    %v354 = vpack.c.b16 %v343, %v342
    %v355 = vpack.c.b16 %v345, %v344
    %v356 = vpack.c.b16 %v347, %v346
    %v357 = vpack.c.b16 %v349, %v348
    %366 = vmatprep.subr.bf16.mxu0 0
    %367 = vmatpush1.bf16.msra.mxu0 %v350
    %368 = vmatprep.subr.bf16.mxu0 0
    %369 = vmatpush1.bf16.msra.mxu0 %v351
    %370 = vmatprep.subr.bf16.mxu0 0
    %371 = vmatpush1.bf16.msra.mxu0 %v352
    %372 = vmatprep.subr.bf16.mxu0 0
    %373 = vmatpush1.bf16.msra.mxu0 %v353
    %374 = vmatprep.subr.bf16.mxu0 0
    %375 = vmatpush1.bf16.msra.mxu0 %v354
    %376 = vmatprep.subr.bf16.mxu0 0
    %377 = vmatpush1.bf16.msra.mxu0 %v355
    %378 = vmatprep.subr.bf16.mxu0 0
    %379 = vmatpush1.bf16.msra.mxu0 %v356
    %380 = vmatprep.subr.bf16.mxu0 0
    %381 = vmatpush1.bf16.msra.mxu0 %v357
    %382 = vmatprep.subr.bf16.mxu0 0
    %383 = vmatpush1.bf16.msra.mxu0 0
    %384 = vmatprep.subr.bf16.mxu0 0
    %385 = vmatpush1.bf16.msra.mxu0 0
    %386 = vmatprep.subr.bf16.mxu0 0
    %387 = vmatpush1.bf16.msra.mxu0 0
    %388 = vmatprep.subr.bf16.mxu0 0
    %389 = vmatpush1.bf16.msra.mxu0 0
    %390 = vmatprep.subr.bf16.mxu0 0
    %391 = vmatpush1.bf16.msra.mxu0 0
    %392 = vmatprep.subr.bf16.mxu0 0
    %393 = vmatpush1.bf16.msra.mxu0 0
    %394 = vmatprep.subr.bf16.mxu0 0
    %395 = vmatpush1.bf16.msra.mxu0 0
    %396 = vmatprep.subr.bf16.mxu0 0
    %397 = vmatpush1.bf16.msra.mxu0 0
    %398 = vmatprep.mubr.bf16.mxu0 0
    %399 = vmatmul.mubr.bf16.gmra.mrb[0].mxu0 %v296
    %v400 = vpop.f32.mrb[0].mxu0
    %v401 = vadd.f32 %v317, %v400
    %v402 = vpop.f32.mrb[0].mxu0
    %v403 = vpop.f32.mrb[0].mxu0
    %v404 = vadd.f32 %v317, %v403
    %v405 = vpop.f32.mrb[0].mxu0
    %406 = vdwg.mxu0
    %407 = vst [vmem:[#allocation8] sm:$0xff] %v401
    %408 = vst [vmem:[#allocation8 + $0x8] sm:$0xff] %v404
    // Predicated region
    $region34: #{fused_mlp_forward.1} parent=1 // pred_check
      _
    $region35: #{fused_mlp_forward.1} parent=1 // pred_check_branch
      %410 = sbr.rel (0) target = $region37
    $region36: #{fused_mlp_forward.1} parent=1 // pred_region
      %s412 = ssub.s32 256, 256
      %413 = vsyncadd [#allocation4], %s412
      %s414 = sshll.u32 [#allocation8], 4
      %s415 = int_to_ptr.vmem [resolvable:$true] %s414
      %420 = dma.vmem_to_hbm [thread:$0]  %s415, 256, %s5, [#allocation4], 128, 128, 8
    $region37: #{fused_mlp_forward.1} parent=1 // pred_fallthru
      _
    // Predicated region
    $region38: #{fused_mlp_forward.1} parent=1 // pred_check
      _
    $region39: #{fused_mlp_forward.1} parent=1 // pred_check_branch
      %422 = sbr.rel (0) target = $region41
    $region40: #{fused_mlp_forward.1} parent=1 // pred_region
      %423 = dma.done [#allocation4], 256
    $region41: #{fused_mlp_forward.1} parent=1 // pred_fallthru
      _
    %424 = vsyncpa [#allocation3], 1
    %425 = vsyncpa [#allocation6], 1
    %426 = vsyncpa [#allocation4], 1

</llo_original>
